<compile_context>
chip_gen: v5e
topology: v5e:2x2
jax: 0.10.0
libtpu: 0.0.40
codegen_flags: <defaults>
</compile_context>

<pallas_src>
import functools

import jax
import jax.numpy as jnp
from jax import lax
from jax.experimental import pallas as pl
from jax.experimental.pallas import tpu as pltpu

MEM_CH = 64            # WorkingMemory.mem_ch
MID_CH = 2 * MEM_CH    # MLP hidden width (out_ch * 2) = 128


def _wm_update_kernel(x_ref, mem_ref, w1a_ref, w1b_ref, w1m_ref, b1_ref,
                      w2_ref, b2_ref, out_ref, sum_acc, max_acc,
                      *, hw_total, hw_tile, mask_tail):
    """Grid = (batch blocks, HW tiles). The HW axis is a reduction axis."""
    t = pl.program_id(1)
    n_hw = pl.num_programs(1)

    @pl.when(t == 0)
    def _init():
        sum_acc[...] = jnp.zeros_like(sum_acc)
        max_acc[...] = jnp.full_like(max_acc, -jnp.inf)

    x = x_ref[...].astype(jnp.float32)                       # (NT, C, HW_TILE)
    if mask_tail:
        lane = lax.broadcasted_iota(jnp.int32, x.shape, 2) + t * hw_tile
        valid = lane < hw_total
        x_sum = jnp.where(valid, x, 0.0)
        x_max = jnp.where(valid, x, -jnp.inf)
    else:
        x_sum = x
        x_max = x

    # Per-tile partial reductions into small persistent accumulators (keeps vreg
    # pressure constant; XLU lane-reduce overlaps the next tile's DMA).
    sum_acc[...] += jnp.sum(x_sum, axis=-1)                  # (NT, C)
    max_acc[...] = jnp.maximum(max_acc[...], jnp.max(x_max, axis=-1))

    @pl.when(t == n_hw - 1)
    def _finalize():
        avg = sum_acc[...] * (1.0 / hw_total)                # AdaptiveAvgPool2d(1)
        mx = max_acc[...]                                    # AdaptiveMaxPool2d(1)
        mem = mem_ref[...].astype(jnp.float32)
        # cat([avg, max, mem]) @ W1^T  ==  avg@W1a + max@W1b + mem@W1m   (exact)
        h = (jnp.dot(avg, w1a_ref[...], preferred_element_type=jnp.float32)
             + jnp.dot(mx, w1b_ref[...], preferred_element_type=jnp.float32)
             + jnp.dot(mem, w1m_ref[...], preferred_element_type=jnp.float32)
             + b1_ref[...])
        h = jnp.maximum(h, 0.0)                              # ReLU
        out = jnp.dot(h, w2_ref[...], preferred_element_type=jnp.float32) + b2_ref[...]
        # Internal math is f32; output is stored in x.dtype (matches the PyTorch module).
        out_ref[...] = out.astype(out_ref.dtype)


def _pick_hw_tile(hw, bytes_per_lane, budget_bytes=4 << 20):
    """Largest lane-dense (multiple-of-128) HW tile within a per-buffer VMEM budget."""
    if hw <= 128:
        return hw                                 # full dim (allowed: equals the array dim)
    cap = max(128, (budget_bytes // bytes_per_lane) // 128 * 128)
    t = min(cap, 2048)
    while t >= 128:                               # prefer a tile that divides HW exactly
        if hw % t == 0:
            return t
        t -= 128
    # Ragged HW: masked tail tiles.
    return max(128, min(cap, (hw // 128) * 128, 512))


def working_memory_update(x, mem, params):
    """x: (N, C, H, W); mem: (N, MEM_CH, 1, 1) or None (first use -> zeros).

    Returns (x unchanged, new_mem of shape (N, MEM_CH, 1, 1))."""
    N, C, H, W = x.shape
    HW = H * W
    if mem is None:                               # WorkingMemory.get() first-use path
        mem = jnp.zeros((N, MEM_CH, 1, 1), x.dtype)

    x3 = x.reshape(N, C, HW)
    mem2 = mem.reshape(N, MEM_CH)
    w1a, w1b, w1m, b1, w2, b2 = params

    # Batch tiling: batch block is a multiple of 8 (sublane-friendly mem/out blocks)
    # or the full batch when it is small / ragged.
    n_tile = 8 if (N % 8 == 0) else N
    num_n = N // n_tile

    c_pad = -(-C // 8) * 8                        # sublane padding of the C axis in VMEM
    hw_tile = _pick_hw_tile(HW, n_tile * c_pad * x3.dtype.itemsize)
    num_hw = pl.cdiv(HW, hw_tile)
    mask_tail = (HW % hw_tile) != 0

    kernel = functools.partial(_wm_update_kernel, hw_total=HW, hw_tile=hw_tile,
                               mask_tail=mask_tail)

    def full_spec(a):
        return pl.BlockSpec(a.shape, lambda n, t: (0,) * a.ndim)

    grid_spec = pltpu.PrefetchScalarGridSpec(
        num_scalar_prefetch=0,
        grid=(num_n, num_hw),
        in_specs=[
            pl.BlockSpec((n_tile, C, hw_tile), lambda n, t: (n, 0, t)),   # x tiles (pipelined)
            pl.BlockSpec((n_tile, MEM_CH), lambda n, t: (n, 0)),          # memory state
            full_spec(w1a), full_spec(w1b), full_spec(w1m), full_spec(b1),
            full_spec(w2), full_spec(b2),
        ],
        out_specs=pl.BlockSpec((n_tile, MEM_CH), lambda n, t: (n, 0)),    # written at t == last
        scratch_shapes=[pltpu.VMEM((n_tile, C), jnp.float32),             # running sum
                        pltpu.VMEM((n_tile, C), jnp.float32)],            # running max
    )

    # Explicit scoped-VMEM budget: double-buffered x tiles + weights + slack,
    # clamped well under v7x's 64 MiB physical VMEM.
    x_block_bytes = n_tile * c_pad * hw_tile * x3.dtype.itemsize
    vmem_limit = int(min(48 << 20, max(16 << 20, 4 * x_block_bytes + (4 << 20))))

    new_mem = pl.pallas_call(
        kernel,
        out_shape=jax.ShapeDtypeStruct((N, MEM_CH), x.dtype),
        grid_spec=grid_spec,
        compiler_params=pltpu.CompilerParams(
            dimension_semantics=("parallel", "arbitrary"),
            vmem_limit_bytes=vmem_limit,
        ),
    )(x3, mem2, w1a, w1b, w1m, b1, w2, b2)

    return x, new_mem.reshape(N, MEM_CH, 1, 1)


def init_params(in_ch, key):
    """Deterministic synthetic init mirroring MLP(in_ch*2 + 64, 64) 1x1 convs."""
    cat_ch = in_ch * 2 + MEM_CH
    k1, k2, k3, k4 = jax.random.split(key, 4)
    w1 = jax.random.normal(k1, (MID_CH, cat_ch), jnp.float32) * 0.05   # in_conv weight
    b1 = jax.random.normal(k2, (1, MID_CH), jnp.float32) * 0.05        # in_conv bias
    w2 = jax.random.normal(k3, (MEM_CH, MID_CH), jnp.float32) * 0.05   # out_conv weight
    b2 = jax.random.normal(k4, (1, MEM_CH), jnp.float32) * 0.05        # out_conv bias
    # Split the first conv weight along its cat-channel axis (avg | max | mem) and
    # transpose everything for y @ W^T-style matmuls inside the kernel.
    w1a = w1[:, :in_ch].T              # (C, MID)
    w1b = w1[:, in_ch:2 * in_ch].T     # (C, MID)
    w1m = w1[:, 2 * in_ch:].T          # (MEM_CH, MID)
    w2t = w2.T                         # (MID, MEM_CH)
    return (w1a, w1b, w1m, b1, w2t, b2), (w1, b1, w2, b2)


def reference(x, mem, raw_params):
    """Pure-JAX reference of the PyTorch forward (sanity check)."""
    w1, b1, w2, b2 = raw_params
    avg = jnp.mean(x, axis=(2, 3))
    mx = jnp.max(x, axis=(2, 3))
    y = jnp.concatenate([avg, mx, mem.reshape(mem.shape[0], MEM_CH)], axis=1)
    h = jnp.maximum(y @ w1.T + b1, 0.0)
    out = h @ w2.T + b2
    return out.reshape(x.shape[0], MEM_CH, 1, 1)


if __name__ == "__main__":
    root = jax.random.PRNGKey(0)

    def run_check(shape, zero_mem, key):
        N, C, H, W = shape
        kx, km, kp = jax.random.split(key, 3)
        x = jax.random.normal(kx, shape, jnp.float32)
        mem = (jnp.zeros((N, MEM_CH, 1, 1), jnp.float32) if zero_mem
               else jax.random.normal(km, (N, MEM_CH, 1, 1), jnp.float32))
        params, raw_params = init_params(C, kp)

        x_out, new_mem = working_memory_update(x, mem, params)
        jax.block_until_ready((x_out, new_mem))

        ref = reference(x, mem, raw_params)
        assert jnp.allclose(x_out, x), "forward must return x unchanged"
        err = float(jnp.max(jnp.abs(new_mem - ref)))
        assert jnp.allclose(new_mem, ref, atol=1e-2, rtol=1e-2), (shape, err)

    k1, k2, k3 = jax.random.split(root, 3)
    run_check((2, 4, 16, 16), True, k1)    # first use: zero memory state (module semantics)
    run_check((2, 4, 18, 18), False, k2)   # ragged H*W -> masked tail tile + multi-step accumulation
    run_check((16, 4, 32, 32), False, k3)  # multiple batch blocks on the "parallel" grid axis
    print("KERNEL_OK")
</pallas_src>

<mosaic_0001>
module attributes {stable_mosaic.version = 11 : i64} {
  func.func @_wm_update_kernel(%arg0: i32, %arg1: i32, %arg2: memref<2x4x256xf32, #tpu.memory_space<vmem>>, %arg3: memref<2x64xf32, #tpu.memory_space<vmem>>, %arg4: memref<4x128xf32, #tpu.memory_space<vmem>>, %arg5: memref<4x128xf32, #tpu.memory_space<vmem>>, %arg6: memref<64x128xf32, #tpu.memory_space<vmem>>, %arg7: memref<1x128xf32, #tpu.memory_space<vmem>>, %arg8: memref<128x64xf32, #tpu.memory_space<vmem>>, %arg9: memref<1x64xf32, #tpu.memory_space<vmem>>, %arg10: memref<2x64xf32, #tpu.memory_space<vmem>>, %arg11: memref<2x4xf32, #tpu.memory_space<vmem>>, %arg12: memref<2x4xf32, #tpu.memory_space<vmem>>) attributes {dimension_semantics = [#tpu.dimension_semantics<parallel>, #tpu.dimension_semantics<arbitrary>], iteration_bounds = array<i64: 1, 1>, scalar_prefetch = 0 : i64, scratch_operands = 2 : i64, tpu.core_type = #tpu.core_type<tc>, window_params = [{transform_indices = @transform_0, window_bounds = array<i64: 2, 4, 256>}, {transform_indices = @transform_1, window_bounds = array<i64: 2, 64>}, {pipeline_mode = #tpu.pipeline_mode<synchronous>, transform_indices = @transform_2, window_bounds = array<i64: 4, 128>}, {pipeline_mode = #tpu.pipeline_mode<synchronous>, transform_indices = @transform_3, window_bounds = array<i64: 4, 128>}, {pipeline_mode = #tpu.pipeline_mode<synchronous>, transform_indices = @transform_4, window_bounds = array<i64: 64, 128>}, {pipeline_mode = #tpu.pipeline_mode<synchronous>, transform_indices = @transform_5, window_bounds = array<i64: 1, 128>}, {pipeline_mode = #tpu.pipeline_mode<synchronous>, transform_indices = @transform_6, window_bounds = array<i64: 128, 64>}, {pipeline_mode = #tpu.pipeline_mode<synchronous>, transform_indices = @transform_7, window_bounds = array<i64: 1, 64>}, {transform_indices = @transform_8, window_bounds = array<i64: 2, 64>}]} {
    %c0_i32 = arith.constant 0 : i32
    %0 = arith.cmpi eq, %arg1, %c0_i32 : i32
    %1 = arith.extui %0 : i1 to i32
    %c0_i32_0 = arith.constant 0 : i32
    %2 = arith.cmpi ne, %1, %c0_i32_0 : i32
    scf.if %2 {
      %cst_14 = arith.constant 0.000000e+00 : f32
      %15 = vector.broadcast %cst_14 : f32 to vector<2x4xf32>
      %c0_15 = arith.constant 0 : index
      %c0_16 = arith.constant 0 : index
      %16 = vector.load %arg11[%c0_15, %c0_16] : memref<2x4xf32, #tpu.memory_space<vmem>>, vector<2x4xf32>
      tpu.vector_store %arg11[%c0_15, %c0_16], %15 {strides = array<i32>} : memref<2x4xf32, #tpu.memory_space<vmem>>, vector<2x4xf32>,
      %cst_17 = arith.constant 0xFF800000 : f32
      %17 = vector.broadcast %cst_17 : f32 to vector<2x4xf32>
      %c0_18 = arith.constant 0 : index
      %c0_19 = arith.constant 0 : index
      %18 = vector.load %arg12[%c0_18, %c0_19] : memref<2x4xf32, #tpu.memory_space<vmem>>, vector<2x4xf32>
      tpu.vector_store %arg12[%c0_18, %c0_19], %17 {strides = array<i32>} : memref<2x4xf32, #tpu.memory_space<vmem>>, vector<2x4xf32>,
    } else {
    }
    %c0 = arith.constant 0 : index
    %c0_1 = arith.constant 0 : index
    %c0_2 = arith.constant 0 : index
    %3 = vector.load %arg2[%c0, %c0_1, %c0_2] : memref<2x4x256xf32, #tpu.memory_space<vmem>>, vector<2x4x256xf32>
    %c0_3 = arith.constant 0 : index
    %c0_4 = arith.constant 0 : index
    %4 = vector.load %arg11[%c0_3, %c0_4] : memref<2x4xf32, #tpu.memory_space<vmem>>, vector<2x4xf32>
    %cst = arith.constant dense<0.000000e+00> : vector<2x4xf32>
    %5 = vector.multi_reduction <add>, %3, %cst [2] : vector<2x4x256xf32> to vector<2x4xf32>
    %6 = arith.addf %4, %5 : vector<2x4xf32>
    %c0_5 = arith.constant 0 : index
    %c0_6 = arith.constant 0 : index
    %7 = vector.load %arg11[%c0_5, %c0_6] : memref<2x4xf32, #tpu.memory_space<vmem>>, vector<2x4xf32>
    tpu.vector_store %arg11[%c0_5, %c0_6], %6 {strides = array<i32>} : memref<2x4xf32, #tpu.memory_space<vmem>>, vector<2x4xf32>,
    %c0_7 = arith.constant 0 : index
    %c0_8 = arith.constant 0 : index
    %8 = vector.load %arg12[%c0_7, %c0_8] : memref<2x4xf32, #tpu.memory_space<vmem>>, vector<2x4xf32>
    %cst_9 = arith.constant dense<0xFF800000> : vector<2x4xf32>
    %9 = vector.multi_reduction <maximumf>, %3, %cst_9 [2] : vector<2x4x256xf32> to vector<2x4xf32>
    %10 = arith.maximumf %8, %9 : vector<2x4xf32>
    %c0_10 = arith.constant 0 : index
    %c0_11 = arith.constant 0 : index
    %11 = vector.load %arg12[%c0_10, %c0_11] : memref<2x4xf32, #tpu.memory_space<vmem>>, vector<2x4xf32>
    tpu.vector_store %arg12[%c0_10, %c0_11], %10 {strides = array<i32>} : memref<2x4xf32, #tpu.memory_space<vmem>>, vector<2x4xf32>,
    %c0_i32_12 = arith.constant 0 : i32
    %12 = arith.cmpi eq, %arg1, %c0_i32_12 : i32
    %13 = arith.extui %12 : i1 to i32
    %c0_i32_13 = arith.constant 0 : i32
    %14 = arith.cmpi ne, %13, %c0_i32_13 : i32
    scf.if %14 {
      %c0_14 = arith.constant 0 : index
      %c0_15 = arith.constant 0 : index
      %15 = vector.load %arg11[%c0_14, %c0_15] : memref<2x4xf32, #tpu.memory_space<vmem>>, vector<2x4xf32>
      %cst_16 = arith.constant 3.906250e-03 : f32
      %16 = vector.broadcast %cst_16 : f32 to vector<2x4xf32>
      %17 = arith.mulf %15, %16 : vector<2x4xf32>
      %c0_17 = arith.constant 0 : index
      %c0_18 = arith.constant 0 : index
      %18 = vector.load %arg12[%c0_17, %c0_18] : memref<2x4xf32, #tpu.memory_space<vmem>>, vector<2x4xf32>
      %c0_19 = arith.constant 0 : index
      %c0_20 = arith.constant 0 : index
      %19 = vector.load %arg3[%c0_19, %c0_20] : memref<2x64xf32, #tpu.memory_space<vmem>>, vector<2x64xf32>
      %c0_21 = arith.constant 0 : index
      %c0_22 = arith.constant 0 : index
      %20 = vector.load %arg4[%c0_21, %c0_22] : memref<4x128xf32, #tpu.memory_space<vmem>>, vector<4x128xf32>
      %cst_23 = arith.constant dense<0.000000e+00> : vector<2x128xf32>
      %21 = tpu.matmul %17, %20, %cst_23 {dimension_numbers = #tpu.dot_dimension_numbers<[1], [0], [0], [1], [0, 0, 1, 1], [], []>} : vector<2x4xf32>, vector<4x128xf32>, vector<2x128xf32> -> vector<2x128xf32>
      %c0_24 = arith.constant 0 : index
      %c0_25 = arith.constant 0 : index
      %22 = vector.load %arg5[%c0_24, %c0_25] : memref<4x128xf32, #tpu.memory_space<vmem>>, vector<4x128xf32>
      %cst_26 = arith.constant dense<0.000000e+00> : vector<2x128xf32>
      %23 = tpu.matmul %18, %22, %cst_26 {dimension_numbers = #tpu.dot_dimension_numbers<[1], [0], [0], [1], [0, 0, 1, 1], [], []>} : vector<2x4xf32>, vector<4x128xf32>, vector<2x128xf32> -> vector<2x128xf32>
      %24 = arith.addf %21, %23 : vector<2x128xf32>
      %c0_27 = arith.constant 0 : index
      %c0_28 = arith.constant 0 : index
      %25 = vector.load %arg6[%c0_27, %c0_28] : memref<64x128xf32, #tpu.memory_space<vmem>>, vector<64x128xf32>
      %cst_29 = arith.constant dense<0.000000e+00> : vector<2x128xf32>
      %26 = tpu.matmul %19, %25, %cst_29 {dimension_numbers = #tpu.dot_dimension_numbers<[1], [0], [0], [1], [0, 0, 1, 1], [], []>} : vector<2x64xf32>, vector<64x128xf32>, vector<2x128xf32> -> vector<2x128xf32>
      %27 = arith.addf %24, %26 : vector<2x128xf32>
      %c0_30 = arith.constant 0 : index
      %c0_31 = arith.constant 0 : index
      %28 = vector.load %arg7[%c0_30, %c0_31] : memref<1x128xf32, #tpu.memory_space<vmem>>, vector<1x128xf32>
      %29 = vector.broadcast %28 : vector<1x128xf32> to vector<2x128xf32>
      %30 = arith.addf %27, %29 : vector<2x128xf32>
      %cst_32 = arith.constant 0.000000e+00 : f32
      %31 = vector.broadcast %cst_32 : f32 to vector<2x128xf32>
      %32 = arith.maximumf %30, %31 : vector<2x128xf32>
      %c0_33 = arith.constant 0 : index
      %c0_34 = arith.constant 0 : index
      %33 = vector.load %arg8[%c0_33, %c0_34] : memref<128x64xf32, #tpu.memory_space<vmem>>, vector<128x64xf32>
      %cst_35 = arith.constant dense<0.000000e+00> : vector<2x64xf32>
      %34 = tpu.matmul %32, %33, %cst_35 {dimension_numbers = #tpu.dot_dimension_numbers<[1], [0], [0], [1], [0, 0, 1, 1], [], []>} : vector<2x128xf32>, vector<128x64xf32>, vector<2x64xf32> -> vector<2x64xf32>
      %c0_36 = arith.constant 0 : index
      %c0_37 = arith.constant 0 : index
      %35 = vector.load %arg9[%c0_36, %c0_37] : memref<1x64xf32, #tpu.memory_space<vmem>>, vector<1x64xf32>
      %36 = vector.broadcast %35 : vector<1x64xf32> to vector<2x64xf32>
      %37 = arith.addf %34, %36 : vector<2x64xf32>
      %c0_38 = arith.constant 0 : index
      %c0_39 = arith.constant 0 : index
      %38 = vector.load %arg10[%c0_38, %c0_39] : memref<2x64xf32, #tpu.memory_space<vmem>>, vector<2x64xf32>
      tpu.vector_store %arg10[%c0_38, %c0_39], %37 {strides = array<i32>} : memref<2x64xf32, #tpu.memory_space<vmem>>, vector<2x64xf32>,
    } else {
    }
    return
  }
  func.func @transform_0(%arg0: i32, %arg1: i32) -> (i32, i32, i32) {
    %c0_i32 = arith.constant 0 : i32
    %c0_i32_0 = arith.constant 0 : i32
    return %arg0, %c0_i32, %arg1 : i32, i32, i32
  }
  func.func @transform_1(%arg0: i32, %arg1: i32) -> (i32, i32) {
    %c0_i32 = arith.constant 0 : i32
    %c0_i32_0 = arith.constant 0 : i32
    return %arg0, %c0_i32 : i32, i32
  }
  func.func @transform_2(%arg0: i32, %arg1: i32) -> (i32, i32) {
    %c0_i32 = arith.constant 0 : i32
    %c0_i32_0 = arith.constant 0 : i32
    %c0_i32_1 = arith.constant 0 : i32
    return %c0_i32, %c0_i32_0 : i32, i32
  }
  func.func @transform_3(%arg0: i32, %arg1: i32) -> (i32, i32) {
    %c0_i32 = arith.constant 0 : i32
    %c0_i32_0 = arith.constant 0 : i32
    %c0_i32_1 = arith.constant 0 : i32
    return %c0_i32, %c0_i32_0 : i32, i32
  }
  func.func @transform_4(%arg0: i32, %arg1: i32) -> (i32, i32) {
    %c0_i32 = arith.constant 0 : i32
    %c0_i32_0 = arith.constant 0 : i32
    %c0_i32_1 = arith.constant 0 : i32
    return %c0_i32, %c0_i32_0 : i32, i32
  }
  func.func @transform_5(%arg0: i32, %arg1: i32) -> (i32, i32) {
    %c0_i32 = arith.constant 0 : i32
    %c0_i32_0 = arith.constant 0 : i32
    %c0_i32_1 = arith.constant 0 : i32
    return %c0_i32, %c0_i32_0 : i32, i32
  }
  func.func @transform_6(%arg0: i32, %arg1: i32) -> (i32, i32) {
    %c0_i32 = arith.constant 0 : i32
    %c0_i32_0 = arith.constant 0 : i32
    %c0_i32_1 = arith.constant 0 : i32
    return %c0_i32, %c0_i32_0 : i32, i32
  }
  func.func @transform_7(%arg0: i32, %arg1: i32) -> (i32, i32) {
    %c0_i32 = arith.constant 0 : i32
    %c0_i32_0 = arith.constant 0 : i32
    %c0_i32_1 = arith.constant 0 : i32
    return %c0_i32, %c0_i32_0 : i32, i32
  }
  func.func @transform_8(%arg0: i32, %arg1: i32) -> (i32, i32) {
    %c0_i32 = arith.constant 0 : i32
    %c0_i32_0 = arith.constant 0 : i32
    return %arg0, %c0_i32 : i32, i32
  }
}

</mosaic_0001>

<llo_original>
// kernel: tpu_custom_call.1
$region0: #{tpu_custom_call.1}
  #allocation0 [shape = 'u32[]', space=smem, size = 0x4, offset = 0x4, fixed_abs, tag = 'smem constant byte address 0x4 - core index']
  #allocation1 [shape = 'u32[72,128]{1,0:T(1,128)}', space=vmem, size = 0x9000, scoped, tag = 'internal scratch']
  #allocation2 [shape = 'f32[2,4]{1,0:T(2,128)}', space=vmem, size = 0x400, scoped, tag = 'scratch operand']
  #allocation3 [shape = 'f32[2,4]{1,0:T(2,128)}', space=vmem, size = 0x400, scoped, tag = 'scratch operand']
  %s0 = inlined_call_operand.vmem [shape: f32[2,4,256], index: 0, kind: input, shape index: {}]
  %s1 = inlined_call_operand.vmem [shape: f32[2,64], index: 1, kind: input, shape index: {}]
  %s2 = inlined_call_operand.vmem [shape: f32[4,128], index: 2, kind: input, shape index: {}]
  %s3 = inlined_call_operand.vmem [shape: f32[4,128], index: 3, kind: input, shape index: {}]
  %s4 = inlined_call_operand.vmem [shape: f32[64,128], index: 4, kind: input, shape index: {}]
  %s5 = inlined_call_operand.vmem [shape: f32[1,128], index: 5, kind: input, shape index: {}]
  %s6 = inlined_call_operand.vmem [shape: f32[128,64], index: 6, kind: input, shape index: {}]
  %s7 = inlined_call_operand.vmem [shape: f32[1,64], index: 7, kind: input, shape index: {}]
  %s8 = inlined_call_operand.hbm [shape: f32[2,64], index: 8, kind: output, shape index: {}]
  %s9 = sld [smem:[#allocation0]]
  $region50: #{tpu_custom_call.1} parent=0
    _
  %s11 = ssub.s32 1, %s9
  %s12 = scalar_select 0, %s11, %s9
  $region1: #{tpu_custom_call.1} parent=0
    #allocation4 [shape = 'u8[1024]{0}', space=vmem, size = 0x400, scoped, tag = 'output window, operand 0, single buffered']
    #allocation5 [shape = 's32[1]{0}', space=sflag, size = 0x4, scoped, tag = 'scoped memory for tpu_custom_call.1']
    %13 = vsyncpa [#allocation5], 0
    // Predicated region
    $region2: #{tpu_custom_call.1} parent=1 // pred_check
      _
    $region3: #{tpu_custom_call.1} parent=1 // pred_check_branch
      %15 = sbr.rel (0) target = $region5
    $region4: #{tpu_custom_call.1} parent=1 // pred_region
      _
    $region5: #{tpu_custom_call.1} parent=1 // pred_fallthru
      _
    // Predicated region
    $region6: #{tpu_custom_call.1} parent=1 // pred_check
      _
    $region7: #{tpu_custom_call.1} parent=1 // pred_check_branch
      %17 = sbr.rel (0) target = $region9
    $region8: #{tpu_custom_call.1} parent=1 // pred_region
      _
    $region9: #{tpu_custom_call.1} parent=1 // pred_fallthru
      _
    // Predicated region
    $region10: #{tpu_custom_call.1} parent=1 // pred_check
      _
    $region11: #{tpu_custom_call.1} parent=1 // pred_check_branch
      %19 = sbr.rel (0) target = $region13
    $region12: #{tpu_custom_call.1} parent=1 // pred_region
      _
    $region13: #{tpu_custom_call.1} parent=1 // pred_fallthru
      _
    // Predicated region
    $region14: #{tpu_custom_call.1} parent=1 // pred_check
      _
    $region15: #{tpu_custom_call.1} parent=1 // pred_check_branch
      %21 = sbr.rel (0) target = $region17
    $region16: #{tpu_custom_call.1} parent=1 // pred_region
      _
    $region17: #{tpu_custom_call.1} parent=1 // pred_fallthru
      _
    // Predicated region
    $region18: #{tpu_custom_call.1} parent=1 // pred_check
      _
    $region19: #{tpu_custom_call.1} parent=1 // pred_check_branch
      %23 = sbr.rel (0) target = $region21
    $region20: #{tpu_custom_call.1} parent=1 // pred_region
      _
    $region21: #{tpu_custom_call.1} parent=1 // pred_fallthru
      _
    // Predicated region
    $region22: #{tpu_custom_call.1} parent=1 // pred_check
      _
    $region23: #{tpu_custom_call.1} parent=1 // pred_check_branch
      %25 = sbr.rel (0) target = $region25
    $region24: #{tpu_custom_call.1} parent=1 // pred_region
      _
    $region25: #{tpu_custom_call.1} parent=1 // pred_fallthru
      _
    // Predicated region
    $region26: #{tpu_custom_call.1} parent=1 // pred_check
      _
    $region27: #{tpu_custom_call.1} parent=1 // pred_check_branch
      %27 = sbr.rel (0) target = $region29
    $region28: #{tpu_custom_call.1} parent=1 // pred_region
      _
    $region29: #{tpu_custom_call.1} parent=1 // pred_fallthru
      _
    // Predicated region
    $region30: #{tpu_custom_call.1} parent=1 // pred_check
      _
    $region31: #{tpu_custom_call.1} parent=1 // pred_check_branch
      %29 = sbr.rel (0) target = $region33
    $region32: #{tpu_custom_call.1} parent=1 // pred_region
      _
    $region33: #{tpu_custom_call.1} parent=1 // pred_fallthru
      _
    %p30 = scmp.eq.s32.totalorder 0, 0
    // Predicated region
    $region34: #{tpu_custom_call.1} parent=1 // pred_check
      %p31 = pneg %p30
    $region35: #{tpu_custom_call.1} parent=1 // pred_check_branch
      %33 = sbr.rel (%p31) target = $region37
    $region36: #{tpu_custom_call.1} parent=1 // pred_region
      %vm34 = vcmask 25600
      %35 = vst.msk [vmem:[#allocation2] sm:$0x3] %vm34, 0.0
      %36 = vst.msk [vmem:[#allocation3] sm:$0x3] %vm34, -inf
    $region37: #{tpu_custom_call.1} parent=1 // pred_fallthru
      _
    %v37 = vld [vmem:[%s0] sm:$0xff]
    %v38 = vld [vmem:[%s0 + $0x8] sm:$0xff]
    %v39 = vld [vmem:[#allocation2] sm:$0x3]
    %42 = vst [vmem:[#allocation1] ss:$2 sm:$0xff] %v37
    %v43 = vld.sshfl [vmem:[#allocation1] sm:$0xff pattern:$0x75316420]
    %v44 = vld.sshfl [vmem:[#allocation1 + $0x8] sm:$0xff pattern:$0x75316420]
    %s45 = scalar_lea.vmem [#allocation1], 16
    %46 = vst [vmem:[%s45] ss:$2 sm:$0xff] %v38
    %v47 = vld.sshfl [vmem:[#allocation1 + $0x10] sm:$0xff pattern:$0x75316420]
    %v48 = vld.sshfl [vmem:[#allocation1 + $0x18] sm:$0xff pattern:$0x75316420]
    %vm53 = vcmask 1043456
    %v54 = vsel %vm53, %v43, 0.0
    %v55 = vsel %vm53, %v44, 0.0
    %v56 = vadd.f32 %v54, %v55
    %57 = vadd.xlane.f32.xlu0 %v56
    %v58 = vpop.xlane.xlu0 %57
    %v59 = vsel %vm53, %v47, 0.0
    %v60 = vsel %vm53, %v48, 0.0
    %v61 = vadd.f32 %v59, %v60
    %62 = vadd.xlane.f32.xlu0 %v61
    %v63 = vpop.xlane.xlu0 %62
    %v66 = vlaneseq
    %v67 = vand.u32 %v66, 127
    %v68 = vperm.slane %v58, %v67
    %v69 = vperm.slane %v63, %v67
    %vm70 = vcmask 1041409
    %v71 = vsel %vm70, %v69, %v68
    %v73 = vadd.f32 %v39, %v71
    %vm74 = vcmask 25600
    %75 = vst.msk [vmem:[#allocation2] sm:$0x3] %vm74, %v73
    %v76 = vld [vmem:[#allocation3] sm:$0x3]
    %77 = vst [vmem:[#allocation1] ss:$2 sm:$0xff] %v37
    %v78 = vld.sshfl [vmem:[#allocation1] sm:$0xff pattern:$0x75316420]
    %v79 = vld.sshfl [vmem:[#allocation1 + $0x8] sm:$0xff pattern:$0x75316420]
    %s80 = scalar_lea.vmem [#allocation1], 16
    %81 = vst [vmem:[%s80] ss:$2 sm:$0xff] %v38
    %v82 = vld.sshfl [vmem:[#allocation1 + $0x10] sm:$0xff pattern:$0x75316420]
    %v83 = vld.sshfl [vmem:[#allocation1 + $0x18] sm:$0xff pattern:$0x75316420]
    %v88 = vsel %vm53, %v78, -inf
    %v89 = vsel %vm53, %v79, -inf
    %v90 = vmax.f32 %v88, %v89
    %91 = vmax.xlane.f32.xlu0 %v90
    %v92 = vpop.xlane.xlu0 %91
    %v93 = vsel %vm53, %v82, -inf
    %v94 = vsel %vm53, %v83, -inf
    %v95 = vmax.f32 %v93, %v94
    %96 = vmax.xlane.f32.xlu0 %v95
    %v97 = vpop.xlane.xlu0 %96
    %v100 = vperm.slane %v92, %v67
    %v101 = vperm.slane %v97, %v67
    %v102 = vsel %vm70, %v101, %v100
    %v104 = vmax.f32 %v76, %v102
    %105 = vst.msk [vmem:[#allocation3] sm:$0x3] %vm74, %v104
    // Predicated region
    $region38: #{tpu_custom_call.1} parent=1 // pred_check
      %p106 = pneg %p30
    $region39: #{tpu_custom_call.1} parent=1 // pred_check_branch
      %108 = sbr.rel (%p106) target = $region41
    $region40: #{tpu_custom_call.1} parent=1 // pred_region
      %v109 = vld [vmem:[#allocation2] sm:$0x3]
      %v110 = vmul.f32 %v109, 0.00390625
      %v111 = vld [vmem:[#allocation3] sm:$0x3]
      %v112 = vld [vmem:[%s1] sm:$0x3]
      %v113 = vld [vmem:[%s2] sm:$0xf]
      %v114 = vld [vmem:[%s3] sm:$0xf]
      %vm115 = vcmask 31744
      %v117 = vsel %vm115, %v111, 0
      %v120 = vsel %vm53, %v114, 0
      %122 = vmatpush.msra.mxu0 0.0
      %123 = vmatpush.msra.mxu0 0.0
      %124 = vmatpush.msra.mxu0 0.0
      %125 = vmatpush.msra.mxu0 0.0
      %126 = vmatpush.msra.mxu0 0.0
      %127 = vmatpush.msra.mxu0 0.0
      %128 = vmatpush.msra.mxu0 0.0
      %129 = vmatpush.msra.mxu0 0.0
      %130 = vmatpush.msra.mxu0 0.0
      %131 = vmatpush.msra.mxu0 0.0
      %132 = vmatpush.msra.mxu0 0.0
      %133 = vmatpush.msra.mxu0 0.0
      %134 = vmatpush.msra.mxu0 0.0
      %135 = vmatpush.msra.mxu0 0.0
      %136 = vmatpush.msra.mxu0 0.0
      %137 = vmatpush.msra.mxu0 %v120
      %138 = vmatmul.f32.gmra.mxu0 %v117
      %v139 = vpop.f32.mrf.mxu0
      %v140 = vadd.f32 0.0, %v139
      %141 = vdwg.mxu0
      %v143 = vsel %vm115, %v110, 0
      %v146 = vsel %vm53, %v113, 0
      %148 = vmatpush.msra.mxu0 0.0
      %149 = vmatpush.msra.mxu0 0.0
      %150 = vmatpush.msra.mxu0 0.0
      %151 = vmatpush.msra.mxu0 0.0
      %152 = vmatpush.msra.mxu0 0.0
      %153 = vmatpush.msra.mxu0 0.0
      %154 = vmatpush.msra.mxu0 0.0
      %155 = vmatpush.msra.mxu0 0.0
      %156 = vmatpush.msra.mxu0 0.0
      %157 = vmatpush.msra.mxu0 0.0
      %158 = vmatpush.msra.mxu0 0.0
      %159 = vmatpush.msra.mxu0 0.0
      %160 = vmatpush.msra.mxu0 0.0
      %161 = vmatpush.msra.mxu0 0.0
      %162 = vmatpush.msra.mxu0 0.0
      %163 = vmatpush.msra.mxu0 %v146
      %164 = vmatmul.f32.gmra.mxu0 %v143
      %v165 = vpop.f32.mrf.mxu0
      %v166 = vadd.f32 %v140, %v165
      %167 = vdwg.mxu0
      %v168 = vld [vmem:[%s4] sm:$0xff]
      %v169 = vld [vmem:[%s4 + $0x8] sm:$0xff]
      %v170 = vld [vmem:[%s4 + $0x10] sm:$0xff]
      %v171 = vld [vmem:[%s4 + $0x18] sm:$0xff]
      %v172 = vld [vmem:[%s4 + $0x20] sm:$0xff]
      %v173 = vld [vmem:[%s4 + $0x28] sm:$0xff]
      %v174 = vld [vmem:[%s4 + $0x30] sm:$0xff]
      %v175 = vld [vmem:[%s4 + $0x38] sm:$0xff]
      %vm176 = vcmask 523264
      %v178 = vsel %vm176, %v112, 0
      %180 = vmatpush.msra.mxu0 0.0
      %181 = vmatpush.msra.mxu0 0.0
      %182 = vmatpush.msra.mxu0 0.0
      %183 = vmatpush.msra.mxu0 0.0
      %184 = vmatpush.msra.mxu0 0.0
      %185 = vmatpush.msra.mxu0 0.0
      %186 = vmatpush.msra.mxu0 0.0
      %187 = vmatpush.msra.mxu0 0.0
      %188 = vmatpush.msra.mxu0 %v175
      %189 = vmatpush.msra.mxu0 %v174
      %190 = vmatpush.msra.mxu0 %v173
      %191 = vmatpush.msra.mxu0 %v172
      %192 = vmatpush.msra.mxu0 %v171
      %193 = vmatpush.msra.mxu0 %v170
      %194 = vmatpush.msra.mxu0 %v169
      %195 = vmatpush.msra.mxu0 %v168
      %196 = vmatmul.f32.gmra.mxu0 %v178
      %v197 = vpop.f32.mrf.mxu0
      %v198 = vadd.f32 0.0, %v197
      %199 = vdwg.mxu0
      %v200 = vadd.f32 %v166, %v198
      %v201 = vld [vmem:[%s5] sm:$0x1]
      %v203 = vperm.slane %v201, 0
      %v205 = vadd.f32 %v200, %v203
      %v206 = vmax.f32 %v205, 0.0
      %v207 = vld [vmem:[%s6] sm:$0xff]
      %v208 = vld [vmem:[%s6 + $0x8] sm:$0xff]
      %v209 = vld [vmem:[%s6 + $0x10] sm:$0xff]
      %v210 = vld [vmem:[%s6 + $0x18] sm:$0xff]
      %v211 = vld [vmem:[%s6 + $0x20] sm:$0xff]
      %v212 = vld [vmem:[%s6 + $0x28] sm:$0xff]
      %v213 = vld [vmem:[%s6 + $0x30] sm:$0xff]
      %v214 = vld [vmem:[%s6 + $0x38] sm:$0xff]
      %v215 = vld [vmem:[%s6 + $0x40] sm:$0xff]
      %v216 = vld [vmem:[%s6 + $0x48] sm:$0xff]
      %v217 = vld [vmem:[%s6 + $0x50] sm:$0xff]
      %v218 = vld [vmem:[%s6 + $0x58] sm:$0xff]
      %v219 = vld [vmem:[%s6 + $0x60] sm:$0xff]
      %v220 = vld [vmem:[%s6 + $0x68] sm:$0xff]
      %v221 = vld [vmem:[%s6 + $0x70] sm:$0xff]
      %v222 = vld [vmem:[%s6 + $0x78] sm:$0xff]
      %v223 = vld [vmem:[%s7] sm:$0x1]
      %v225 = vperm.slane %v223, 0
      %227 = vmatpush.msra.mxu0 %v222
      %228 = vmatpush.msra.mxu0 %v221
      %229 = vmatpush.msra.mxu0 %v220
      %230 = vmatpush.msra.mxu0 %v219
      %231 = vmatpush.msra.mxu0 %v218
      %232 = vmatpush.msra.mxu0 %v217
      %233 = vmatpush.msra.mxu0 %v216
      %234 = vmatpush.msra.mxu0 %v215
      %235 = vmatpush.msra.mxu0 %v214
      %236 = vmatpush.msra.mxu0 %v213
      %237 = vmatpush.msra.mxu0 %v212
      %238 = vmatpush.msra.mxu0 %v211
      %239 = vmatpush.msra.mxu0 %v210
      %240 = vmatpush.msra.mxu0 %v209
      %241 = vmatpush.msra.mxu0 %v208
      %242 = vmatpush.msra.mxu0 %v207
      %243 = vmatmul.f32.gmra.mxu0 %v206
      %v244 = vpop.f32.mrf.mxu0
      %v245 = vadd.f32 %v225, %v244
      %246 = vdwg.mxu0
      %vm247 = vcmask 517120
      %248 = vst.msk [vmem:[#allocation4] sm:$0x3] %vm247, %v245
    $region41: #{tpu_custom_call.1} parent=1 // pred_fallthru
      _
    // Predicated region
    $region42: #{tpu_custom_call.1} parent=1 // pred_check
      _
    $region43: #{tpu_custom_call.1} parent=1 // pred_check_branch
      %250 = sbr.rel (0) target = $region45
    $region44: #{tpu_custom_call.1} parent=1 // pred_region
      %252 = vsyncadd [#allocation5], 0
      %s254 = sshll.u32 [#allocation4], 4
      %s255 = int_to_ptr.vmem [resolvable:$true] %s254
      %s256 = sshll.u32 %s8, 4
      %s257 = int_to_ptr.hbm [resolvable:$true] %s256
      %259 = dma.vmem_to_hbm [thread:$0]  %s255, 32, %s257, [#allocation5]
    $region45: #{tpu_custom_call.1} parent=1 // pred_fallthru
      _
    // Predicated region
    $region46: #{tpu_custom_call.1} parent=1 // pred_check
      _
    $region47: #{tpu_custom_call.1} parent=1 // pred_check_branch
      %261 = sbr.rel (0) target = $region49
    $region48: #{tpu_custom_call.1} parent=1 // pred_region
      %263 = dma.done [#allocation5], 32
    $region49: #{tpu_custom_call.1} parent=1 // pred_fallthru
      _
    %264 = vsyncpa [#allocation5], 1

</llo_original>
